<compile_context>
chip_gen: v7x
topology: tpu7x:2x2x1
jax: 0.10.0
libtpu: 0.0.40
codegen_flags: <defaults>
</compile_context>

<pallas_src>
import jax
import jax.numpy as jnp
from jax.experimental import pallas as pl
from jax.experimental.pallas import tpu as pltpu


def _cdiv(a, b):
    return -(-a // b)


def _round_up(a, b):
    return _cdiv(a, b) * b


def _vmem_budget_bytes():
    """Scoped-VMEM limit to request; conservative across v5e/v6e/v7x."""
    try:
        cap = int(getattr(pltpu.get_tpu_info(), "vmem_capacity_bytes"))
    except Exception:
        cap = 64 << 20  # assume the smallest (v7x per-TensorCore VMEM)
    # 96 MiB on 128 MiB chips (v5e/v6e), 48 MiB on v7x.
    return min(cap * 3 // 4, 96 << 20)


def _conv_relu_stats_kernel(w_ref, xcol_ref, y_ref, stats_ref):
    # w_ref:     (C_out, CK_pad)  bf16   (constant index map -> fetched once)
    # xcol_ref:  (CK_pad, tile_l) bf16   im2col slab for this (b, t) tile
    # y_ref:     (C_out, tile_l)  bf16   ReLU(conv), stored in bf16
    # stats_ref: (C_out, 2)       f32    per-tile [sum, sum_sq] per channel
    y = jnp.dot(w_ref[...], xcol_ref[...], preferred_element_type=jnp.float32)
    y = jnp.maximum(y, 0.0)                        # ReLU (f32, VPU)
    y_ref[...] = y.astype(y_ref.dtype)             # bf16 store (HBM BW saver)
    # Stats from the f32 accumulator, before the bf16 store; slice stores
    # avoid the lane-shuffling concat of the previous version.
    stats_ref[:, 0:1] = jnp.sum(y, axis=1, keepdims=True)
    stats_ref[:, 1:2] = jnp.sum(y * y, axis=1, keepdims=True)


def _bn_apply_kernel(y_ref, scale_ref, shift_ref, out_ref):
    # y_ref: (C_out, tile_l) bf16;  scale/shift: (C_out, 1) f32.
    out_ref[...] = (y_ref[...].astype(jnp.float32) * scale_ref[...]
                    + shift_ref[...]).astype(out_ref.dtype)


def conv1d_relu_bn(x, w, gamma, beta, *, stride=1, padding=0, dilation=1,
                   eps=1e-5, max_tile_l=2048):
    """x: (B, C_in, L); w: (C_out, C_in, K); gamma/beta: (C_out,)."""
    B, C_in, L = x.shape
    C_out, C_in_w, K = w.shape
    assert C_in_w == C_in
    L_out = (L + 2 * padding - dilation * (K - 1) - 1) // stride + 1
    assert L_out > 0
    CK = C_in * K
    CK_pad = _round_up(CK, 256)      # fill the 256-wide MXU contraction dim
    n = B * L_out                    # BN statistics divisor (true count)

    # ---- tile_l selection: largest 128-multiple whose double-buffered
    #      working set fits the per-chip VMEM budget, then split the padded
    #      L axis into equal 128-multiple tiles to minimise padding waste.
    vmem_limit = int(_vmem_budget_bytes())
    budget = vmem_limit * 3 // 4
    out_bytes = jnp.dtype(x.dtype).itemsize

    def _tile_need(t):
        p1 = (2 * 2 * t * (CK_pad + C_out)          # xcol in + y out (bf16, 2-buf)
              + 2 * 2 * C_out * CK_pad              # weights (bf16, 2 buffers)
              + 2 * 4 * C_out * 2)                  # stats
        p2 = 2 * t * C_out * (2 + out_bytes) + 4 * 4 * C_out
        return max(p1, p2)

    tile_cap = max(128, (min(max_tile_l, _round_up(L_out, 128)) // 128) * 128)
    while tile_cap > 128 and _tile_need(tile_cap) > budget:
        tile_cap -= 128

    c_units = _round_up(L_out, 128) // 128          # L axis in 128-col units
    nt = _cdiv(c_units, tile_cap // 128)
    if B == 1 and c_units >= 2:
        nt = max(nt, 2)                             # keep both v7x cores busy
    tl_units = _cdiv(c_units, nt)
    tile_l = tl_units * 128
    num_l_tiles = _cdiv(c_units, tl_units)
    L_out_pad = num_l_tiles * tile_l
    n_pad = B * L_out_pad

    # ---- wrapper-side im2col: bf16, per-batch padded column layout
    #      col = b*L_out_pad + l, no post-stack transpose.
    x_bf = x.astype(jnp.bfloat16)
    x_pad = jnp.pad(x_bf, ((0, 0), (0, 0), (padding, padding)))
    x_pad = x_pad.transpose(1, 0, 2)                            # (C_in, B, Lp)
    span = (L_out - 1) * stride + 1
    taps = [x_pad[:, :, j * dilation: j * dilation + span: stride]
            for j in range(K)]                                   # (C_in,B,L_out)
    xcol = jnp.stack(taps, axis=1)                               # (C_in,K,B,L_out)
    xcol = jnp.pad(xcol, ((0, 0), (0, 0), (0, 0), (0, L_out_pad - L_out)))
    xcol = xcol.reshape(CK, n_pad)                               # row = c*K + k
    xcol = jnp.pad(xcol, ((0, CK_pad - CK), (0, 0)))             # zero reduction pad

    w2 = w.reshape(C_out, CK).astype(jnp.bfloat16)
    w2 = jnp.pad(w2, ((0, 0), (0, CK_pad - CK)))

    cparams = pltpu.CompilerParams(
        dimension_semantics=("parallel", "parallel"),
        vmem_limit_bytes=vmem_limit)

    # ---- pass 1: conv + ReLU (bf16 store) + per-tile partial stats.
    # (If a profile shows the xcol DMA exposed, add
    #  pipeline_mode=pl.Buffered(3) on the xcol in_spec.)
    y_bf, partial = pl.pallas_call(
        _conv_relu_stats_kernel,
        out_shape=(
            jax.ShapeDtypeStruct((B, C_out, L_out_pad), jnp.bfloat16),
            jax.ShapeDtypeStruct((B, num_l_tiles, C_out, 2), jnp.float32),
        ),
        grid=(B, num_l_tiles),
        in_specs=[
            pl.BlockSpec((C_out, CK_pad), lambda b, t: (0, 0)),
            pl.BlockSpec((CK_pad, tile_l),
                         lambda b, t: (0, b * num_l_tiles + t)),
        ],
        out_specs=(
            pl.BlockSpec((None, C_out, tile_l), lambda b, t: (b, 0, t)),
            pl.BlockSpec((None, None, C_out, 2), lambda b, t: (b, t, 0, 0)),
        ),
        compiler_params=cparams,
    )(w2, xcol)

    # ---- tiny per-channel stat combine + fused BN affine (wrapper, f32).
    # (Padding columns are exact zeros after ReLU, so dividing by n is exact.)
    sums = jnp.sum(partial, axis=(0, 1))                         # (C_out, 2)
    mean = sums[:, 0] / n
    var = jnp.maximum(sums[:, 1] / n - mean * mean, 0.0)         # biased var
    inv_std = jax.lax.rsqrt(var + eps)
    scale = (gamma.astype(jnp.float32) * inv_std).reshape(C_out, 1)
    shift = (beta.astype(jnp.float32).reshape(C_out, 1)
             - mean.reshape(C_out, 1) * scale)

    # ---- pass 2: y*scale + shift written straight into NCL layout.
    out_pad = pl.pallas_call(
        _bn_apply_kernel,
        out_shape=jax.ShapeDtypeStruct((B, C_out, L_out_pad), x.dtype),
        grid=(B, num_l_tiles),
        in_specs=[
            pl.BlockSpec((None, C_out, tile_l), lambda b, t: (b, 0, t)),
            pl.BlockSpec((C_out, 1), lambda b, t: (0, 0)),
            pl.BlockSpec((C_out, 1), lambda b, t: (0, 0)),
        ],
        out_specs=pl.BlockSpec((None, C_out, tile_l), lambda b, t: (b, 0, t)),
        compiler_params=cparams,
    )(y_bf, scale, shift)

    # Only a cheap trailing last-dim slice (no transpose) back to (B,C_out,L_out).
    return out_pad[:, :, :L_out] if L_out_pad != L_out else out_pad


def _reference(x, w, gamma, beta, *, stride, padding, dilation, eps):
    # Mirrors kernel precision: bf16 conv operands + f32 accumulation, f32 BN
    # statistics, activation stored/read back as bf16 between the two passes.
    y = jax.lax.conv_general_dilated(
        x.astype(jnp.bfloat16), w.astype(jnp.bfloat16),
        window_strides=(stride,), padding=[(padding, padding)],
        rhs_dilation=(dilation,),
        dimension_numbers=("NCH", "OIH", "NCH"),
        preferred_element_type=jnp.float32)
    y = jnp.maximum(y, 0.0)
    mean = jnp.mean(y, axis=(0, 2), keepdims=True)
    var = jnp.mean((y - mean) ** 2, axis=(0, 2), keepdims=True)
    scale = gamma.reshape(1, -1, 1) * jax.lax.rsqrt(var + eps)
    shift = beta.reshape(1, -1, 1) - mean * scale
    y_q = y.astype(jnp.bfloat16).astype(jnp.float32)   # matches bf16 storage
    return (y_q * scale + shift).astype(x.dtype)


if __name__ == "__main__":
    B, C_in, L = 2, 8, 16
    C_out = 16

    key = jax.random.PRNGKey(0)
    kx, kw, kg, kb = jax.random.split(key, 4)
    x = jax.random.normal(kx, (B, C_in, L), dtype=jnp.float32)
    gamma = 1.0 + 0.1 * jax.random.normal(kg, (C_out,), dtype=jnp.float32)
    beta = 0.1 * jax.random.normal(kb, (C_out,), dtype=jnp.float32)

    # TODO(synk): BatchNorm1d running_mean/running_var buffer updates are
    # module state (not part of the forward output), so they are not produced.

    configs = [
        dict(K=3, stride=1, padding=1, dilation=1),   # typical ECAPA usage
        dict(K=1, stride=1, padding=0, dilation=1),   # module defaults
    ]
    for cfg in configs:
        K = cfg["K"]
        w = jax.random.normal(kw, (C_out, C_in, K), dtype=jnp.float32) * 0.2
        out = conv1d_relu_bn(x, w, gamma, beta, stride=cfg["stride"],
                             padding=cfg["padding"], dilation=cfg["dilation"])
        out = jax.block_until_ready(out)
        ref = _reference(x, w, gamma, beta, stride=cfg["stride"],
                         padding=cfg["padding"], dilation=cfg["dilation"],
                         eps=1e-5)
        assert out.shape == ref.shape, (out.shape, ref.shape)
        abs_err = jnp.abs(out - ref)
        max_err = float(jnp.max(abs_err))
        mean_err = float(jnp.mean(abs_err))
        # Max tolerance covers a single bf16 ulp of the stored activation
        # (kernel and reference may round a borderline value differently);
        # the mean check keeps the comparison sensitive to real bugs.
        assert jnp.allclose(out, ref, atol=2e-2, rtol=2e-2), (cfg, max_err)
        assert mean_err < 2e-3, (cfg, mean_err)

    print("KERNEL_OK")
</pallas_src>

<mosaic_0001>
module attributes {stable_mosaic.version = 11 : i64} {
  func.func @_conv_relu_stats_kernel(%arg0: i32, %arg1: i32, %arg2: memref<16x256xbf16, #tpu.memory_space<vmem>>, %arg3: memref<256x128xbf16, #tpu.memory_space<vmem>>, %arg4: memref<1x16x128xbf16, #tpu.memory_space<vmem>>, %arg5: memref<1x1x16x2xf32, #tpu.memory_space<vmem>>) attributes {dimension_semantics = [#tpu.dimension_semantics<parallel>, #tpu.dimension_semantics<parallel>], iteration_bounds = array<i64: 2, 1>, scalar_prefetch = 0 : i64, scratch_operands = 0 : i64, tpu.core_type = #tpu.core_type<tc>, window_params = [{pipeline_mode = #tpu.pipeline_mode<synchronous>, transform_indices = @transform_0, window_bounds = array<i64: 16, 256>}, {transform_indices = @transform_1, window_bounds = array<i64: 256, 128>}, {transform_indices = @transform_2, window_bounds = array<i64: 1, 16, 128>}, {transform_indices = @transform_3, window_bounds = array<i64: 1, 1, 16, 2>}]} {
    %c0 = arith.constant 0 : index
    %c0_0 = arith.constant 0 : index
    %0 = vector.load %arg2[%c0, %c0_0] : memref<16x256xbf16, #tpu.memory_space<vmem>>, vector<16x256xbf16>
    %c0_1 = arith.constant 0 : index
    %c0_2 = arith.constant 0 : index
    %1 = vector.load %arg3[%c0_1, %c0_2] : memref<256x128xbf16, #tpu.memory_space<vmem>>, vector<256x128xbf16>
    %cst = arith.constant dense<0.000000e+00> : vector<16x128xf32>
    %2 = tpu.matmul %0, %1, %cst {dimension_numbers = #tpu.dot_dimension_numbers<[1], [0], [0], [1], [0, 0, 1, 1], [], []>} : vector<16x256xbf16>, vector<256x128xbf16>, vector<16x128xf32> -> vector<16x128xf32>
    %cst_3 = arith.constant 0.000000e+00 : f32
    %3 = vector.broadcast %cst_3 : f32 to vector<16x128xf32>
    %4 = arith.maximumf %2, %3 : vector<16x128xf32>
    %5 = arith.truncf %4 : vector<16x128xf32> to vector<16x128xbf16>
    %c0_4 = arith.constant 0 : index
    %c0_5 = arith.constant 0 : index
    %c0_6 = arith.constant 0 : index
    %6 = vector.load %arg4[%c0_4, %c0_5, %c0_6] : memref<1x16x128xbf16, #tpu.memory_space<vmem>>, vector<1x16x128xbf16>
    %7 = vector.shape_cast %6 : vector<1x16x128xbf16> to vector<16x128xbf16>
    %8 = vector.shape_cast %5 : vector<16x128xbf16> to vector<1x16x128xbf16>
    tpu.vector_store %arg4[%c0_4, %c0_5, %c0_6], %8 {strides = array<i32>} : memref<1x16x128xbf16, #tpu.memory_space<vmem>>, vector<1x16x128xbf16>,
    %cst_7 = arith.constant dense<0.000000e+00> : vector<16xf32>
    %9 = vector.multi_reduction <add>, %4, %cst_7 [1] : vector<16x128xf32> to vector<16xf32>
    %10 = vector.shape_cast %9 : vector<16xf32> to vector<16x1xf32>
    %c0_8 = arith.constant 0 : index
    %c0_9 = arith.constant 0 : index
    %c0_10 = arith.constant 0 : index
    %c0_11 = arith.constant 0 : index
    %11 = vector.load %arg5[%c0_8, %c0_9, %c0_10, %c0_11] : memref<1x1x16x2xf32, #tpu.memory_space<vmem>>, vector<1x1x16x1xf32>
    %12 = vector.shape_cast %11 : vector<1x1x16x1xf32> to vector<16x1xf32>
    %13 = vector.shape_cast %10 : vector<16x1xf32> to vector<1x1x16x1xf32>
    tpu.vector_store %arg5[%c0_8, %c0_9, %c0_10, %c0_11], %13 {strides = array<i32>} : memref<1x1x16x2xf32, #tpu.memory_space<vmem>>, vector<1x1x16x1xf32>,
    %14 = arith.mulf %4, %4 : vector<16x128xf32>
    %cst_12 = arith.constant dense<0.000000e+00> : vector<16xf32>
    %15 = vector.multi_reduction <add>, %14, %cst_12 [1] : vector<16x128xf32> to vector<16xf32>
    %16 = vector.shape_cast %15 : vector<16xf32> to vector<16x1xf32>
    %c0_13 = arith.constant 0 : index
    %c0_14 = arith.constant 0 : index
    %c0_15 = arith.constant 0 : index
    %c1 = arith.constant 1 : index
    %17 = vector.load %arg5[%c0_13, %c0_14, %c0_15, %c1] : memref<1x1x16x2xf32, #tpu.memory_space<vmem>>, vector<1x1x16x1xf32>
    %18 = vector.shape_cast %17 : vector<1x1x16x1xf32> to vector<16x1xf32>
    %19 = vector.shape_cast %16 : vector<16x1xf32> to vector<1x1x16x1xf32>
    tpu.vector_store %arg5[%c0_13, %c0_14, %c0_15, %c1], %19 {strides = array<i32>} : memref<1x1x16x2xf32, #tpu.memory_space<vmem>>, vector<1x1x16x1xf32>,
    return
  }
  func.func @transform_0(%arg0: i32, %arg1: i32) -> (i32, i32) {
    %c0_i32 = arith.constant 0 : i32
    %c0_i32_0 = arith.constant 0 : i32
    %c0_i32_1 = arith.constant 0 : i32
    return %c0_i32, %c0_i32_0 : i32, i32
  }
  func.func @transform_1(%arg0: i32, %arg1: i32) -> (i32, i32) {
    %c1_i32 = arith.constant 1 : i32
    %0 = arith.muli %arg0, %c1_i32 : i32
    %1 = arith.addi %0, %arg1 : i32
    %c0_i32 = arith.constant 0 : i32
    %c0_i32_0 = arith.constant 0 : i32
    return %c0_i32, %1 : i32, i32
  }
  func.func @transform_2(%arg0: i32, %arg1: i32) -> (i32, i32, i32) {
    %c0_i32 = arith.constant 0 : i32
    %c0_i32_0 = arith.constant 0 : i32
    return %arg0, %c0_i32, %arg1 : i32, i32, i32
  }
  func.func @transform_3(%arg0: i32, %arg1: i32) -> (i32, i32, i32, i32) {
    %c0_i32 = arith.constant 0 : i32
    %c0_i32_0 = arith.constant 0 : i32
    %c0_i32_1 = arith.constant 0 : i32
    return %arg0, %arg1, %c0_i32, %c0_i32_0 : i32, i32, i32, i32
  }
}

</mosaic_0001>

<llo_original>
// kernel: tpu_custom_call.1
$region0: #{tpu_custom_call.1}
  #allocation0 [shape = 'u32[]', space=smem, size = 0x4, offset = 0x4, fixed_abs, tag = 'smem constant byte address 0x4 - core index']
  #allocation1 [shape = 'u32[144,128]{1,0:T(1,128)}', space=vmem, size = 0x12000, scoped, tag = 'internal scratch']
  %s0 = inlined_call_operand.hbm [shape: bf16[16,256], index: 0, kind: input, shape index: {}]
  %s1 = inlined_call_operand.hbm [shape: bf16[256,256], index: 1, kind: input, shape index: {}]
  %s2 = inlined_call_operand.hbm [shape: bf16[2,16,128], index: 2, kind: output, shape index: {0}]
  %s3 = inlined_call_operand.vmem [shape: f32[2,1,16,2], index: 3, kind: output, shape index: {1}]
  %4 = xla_tuple %s2, %s3
  %s5 = sld [smem:[#allocation0]]
  $region57: #{tpu_custom_call.1} parent=0
    _
  %s7 = ssub.s32 1, %s5
  %s8 = scalar_select 0, %s7, %s5
  $region1: #{tpu_custom_call.1} parent=0
    #allocation2 [shape = 'u8[8192]{0}', space=vmem, size = 0x2000, scoped, tag = 'input window, operand 0, single buffered']
    #allocation3 [shape = 's32[2]{0}', space=sflag, size = 0x8, scoped, tag = 'scoped memory for tpu_custom_call.1']
    #allocation4 [shape = 's32[2]{0}', space=sflag, size = 0x8, scoped, tag = 'scoped memory for tpu_custom_call.1']
    #allocation5 [shape = 'u8[131072]{0}', space=vmem, size = 0x20000, scoped, tag = 'input window, operand 1']
    #allocation6 [shape = 's32[2]{0}', space=sflag, size = 0x8, scoped, tag = 'scoped memory for tpu_custom_call.1']
    #allocation7 [shape = 'u8[8192]{0}', space=vmem, size = 0x2000, scoped, tag = 'output window, operand 0']
    %9 = vsyncpa [#allocation3], 0
    %10 = vsyncpa [#allocation6], 0
    %s11 = scalar_lea.sflag [#allocation6], 1
    %12 = vsyncpa %s11, 0
    %13 = vsyncpa [#allocation4], 0
    %s14 = scalar_lea.sflag [#allocation4], 1
    %15 = vsyncpa %s14, 0
    loop: start=0, step=1, limit=4
    $region2: #{tpu_custom_call.1} parent=1 // loop_pre_header
      _
    $region3: #{tpu_custom_call.1} parent=1 // loop_header
      %s17 = sphi 0, %s21
      %p18 = scmp.ge.s32.totalorder %s17, 4
      %s24 = sphi 0, %s36
      %s25 = sphi 0, %s32
      %s26 = sphi 0, %s24
      %s27 = sphi 0, %s25
      %s28 = sphi 0, %s26
      %s29 = sphi 0, %s27
      %s37 = sphi 0, %s37
      %s39 = sphi 0, %s37
      %s40 = sphi 0, %s39
      %s54 = sphi 0, %s40
      %s62 = sphi 0, %s64
      %s65 = sphi 0, %s62
      %s66 = sphi 0, %s65
      %s82 = sphi 0, %s66
      %s90 = sphi 0, %s92
      %s93 = sphi 0, %s90
      %s94 = sphi 0, %s93
      %s110 = sphi 0, %s94
      %s118 = sphi 0, %s120
      %s121 = sphi 0, %s118
      %s122 = sphi 0, %s121
      %s138 = sphi 0, %s122
    $region4: #{tpu_custom_call.1} parent=1 // loop_header_branch
      %20 = sbr.rel (%p18) target = $region8
    $region5: #{tpu_custom_call.1} parent=1 // loop_body
      %s22 = ssub.s32 %s17, 1
      %s23 = ssub.s32 %s17, 2
      %s30 = sadd.s32 1, %s25
      %p31 = scmp.ge.s32.totalorder %s30, 1
      %s32 = scalar_select %p31, 0, %s30
      %s33 = sadd.s32 1, %s24
      %s34 = scalar_select %p31, %s33, %s24
      %p35 = scmp.ge.s32.totalorder %s34, 2
      %s36 = scalar_select %p35, 0, %s34
      %s38 = sadd.s32 %s37, 1
      %p41 = scmp.eq.s32.totalorder %s17, 1
      %p42 = scmp.ne.s32.totalorder %s37, %s39
      %p43 = scmp.eq.s32.totalorder %s17, 0
      %p44 = por %p42, %p43
      %p45 = scmp.ne.s32.totalorder %s37, %s39
      %p46 = scmp.eq.s32.totalorder %s22, 1
      %p47 = por %p45, %p46
      %p48 = scmp.ne.s32.totalorder %s39, %s40
      %p49 = scmp.eq.s32.totalorder %s22, 0
      %p50 = por %p48, %p49
      %p51 = scmp.ne.s32.totalorder %s39, %s40
      %p52 = scmp.eq.s32.totalorder %s23, 1
      %p53 = por %p51, %p52
      %p55 = scmp.ne.s32.totalorder %s40, %s54
      %p56 = scmp.eq.s32.totalorder %s23, 0
      %p57 = por %p55, %p56
      %s58 = sadd.s32 %s24, %s25
      %s59 = sadd.s32 %s36, %s32
      %s60 = ssub.s32 %s58, %s59
      %p61 = scmp.eq.s32.totalorder %s60, 0
      %s63 = sadd.s32 %s62, 1
      %s64 = scalar_select %p61, %s62, %s63
      %p67 = pneg %p61
      %p68 = scmp.eq.s32.totalorder %s17, 1
      %p69 = por %p67, %p68
      %p70 = scmp.ne.s32.totalorder %s62, %s65
      %p71 = scmp.eq.s32.totalorder %s17, 0
      %p72 = por %p70, %p71
      %p73 = scmp.ne.s32.totalorder %s62, %s65
      %p74 = scmp.eq.s32.totalorder %s22, 1
      %p75 = por %p73, %p74
      %p76 = scmp.ne.s32.totalorder %s65, %s66
      %p77 = scmp.eq.s32.totalorder %s22, 0
      %p78 = por %p76, %p77
      %p79 = scmp.ne.s32.totalorder %s65, %s66
      %p80 = scmp.eq.s32.totalorder %s23, 1
      %p81 = por %p79, %p80
      %p83 = scmp.ne.s32.totalorder %s66, %s82
      %p84 = scmp.eq.s32.totalorder %s23, 0
      %p85 = por %p83, %p84
      %s86 = ssub.s32 %s24, %s36
      %s87 = ssub.s32 %s25, %s32
      %s88 = sor.u32 %s86, %s87
      %p89 = scmp.eq.s32.totalorder %s88, 0
      %s91 = sadd.s32 %s90, 1
      %s92 = scalar_select %p89, %s90, %s91
      %p95 = pneg %p89
      %p96 = scmp.eq.s32.totalorder %s17, 1
      %p97 = por %p95, %p96
      %p98 = scmp.ne.s32.totalorder %s90, %s93
      %p99 = scmp.eq.s32.totalorder %s17, 0
      %p100 = por %p98, %p99
      %p101 = scmp.ne.s32.totalorder %s90, %s93
      %p102 = scmp.eq.s32.totalorder %s22, 1
      %p103 = por %p101, %p102
      %p104 = scmp.ne.s32.totalorder %s93, %s94
      %p105 = scmp.eq.s32.totalorder %s22, 0
      %p106 = por %p104, %p105
      %p107 = scmp.ne.s32.totalorder %s93, %s94
      %p108 = scmp.eq.s32.totalorder %s23, 1
      %p109 = por %p107, %p108
      %p111 = scmp.ne.s32.totalorder %s94, %s110
      %p112 = scmp.eq.s32.totalorder %s23, 0
      %p113 = por %p111, %p112
      %s114 = ssub.s32 %s24, %s36
      %s115 = ssub.s32 %s25, %s32
      %s116 = sor.u32 %s114, %s115
      %p117 = scmp.eq.s32.totalorder %s116, 0
      %s119 = sadd.s32 %s118, 1
      %s120 = scalar_select %p117, %s118, %s119
      %p123 = pneg %p117
      %p124 = scmp.eq.s32.totalorder %s17, 1
      %p125 = por %p123, %p124
      %p126 = scmp.ne.s32.totalorder %s118, %s121
      %p127 = scmp.eq.s32.totalorder %s17, 0
      %p128 = por %p126, %p127
      %p129 = scmp.ne.s32.totalorder %s118, %s121
      %p130 = scmp.eq.s32.totalorder %s22, 1
      %p131 = por %p129, %p130
      %p132 = scmp.ne.s32.totalorder %s121, %s122
      %p133 = scmp.eq.s32.totalorder %s22, 0
      %p134 = por %p132, %p133
      %p135 = scmp.ne.s32.totalorder %s121, %s122
      %p136 = scmp.eq.s32.totalorder %s23, 1
      %p137 = por %p135, %p136
      %p139 = scmp.ne.s32.totalorder %s122, %s138
      %p140 = scmp.eq.s32.totalorder %s23, 0
      %p141 = por %p139, %p140
      %p142 = scmp.le.s32.totalorder 1, %s17
      %p143 = scmp.lt.s32.totalorder %s17, 3
      %p144 = pnand %p142, %p143
      %p145 = pneg %p144
      // Predicated region
      $region9: #{tpu_custom_call.1} parent=5 // pred_check
        _
      $region10: #{tpu_custom_call.1} parent=5 // pred_check_branch
        %147 = sbr.rel (%p144) target = $region12
      $region11: #{tpu_custom_call.1} parent=5 // pred_region
        %s148 = ssub.s32 %s17, 1
        // Predicated region
        $region13: #{tpu_custom_call.1} parent=11 // pred_check
          %p149 = pneg %p50
        $region14: #{tpu_custom_call.1} parent=11 // pred_check_branch
          %151 = sbr.rel (%p149) target = $region16
        $region15: #{tpu_custom_call.1} parent=11 // pred_region
          %s153 = ssub.s32 256, 256
          %154 = vsyncadd [#allocation3], %s153
          %s155 = sshll.u32 [#allocation2], 4
          %s156 = int_to_ptr.vmem [resolvable:$true] %s155
          %161 = dma.hbm_to_vmem [thread:$0]  %s0, 256, %s156, [#allocation3], 128, 128, 8
        $region16: #{tpu_custom_call.1} parent=11 // pred_fallthru
          _
      $region12: #{tpu_custom_call.1} parent=5 // pred_fallthru
        _
      %p162 = scmp.lt.s32.totalorder %s17, 2
      // Predicated region
      $region17: #{tpu_custom_call.1} parent=5 // pred_check
        %p163 = pneg %p162
      $region18: #{tpu_custom_call.1} parent=5 // pred_check_branch
        %165 = sbr.rel (%p163) target = $region20
      $region19: #{tpu_custom_call.1} parent=5 // pred_region
        // Predicated region
        $region21: #{tpu_custom_call.1} parent=19 // pred_check
          %p166 = pneg %p72
        $region22: #{tpu_custom_call.1} parent=19 // pred_check_branch
          %168 = sbr.rel (%p166) target = $region24
        $region23: #{tpu_custom_call.1} parent=19 // pred_region
          %s169 = sand.u32 %s62, 1
          %s170 = scalar_lea.sflag [#allocation6], %s169
          %s171 = sand.u32 %s62, 1
          %s172 = smul.addr %s171, 128
          %s173 = scalar_lea.vmem [#allocation5], %s172
          %s174 = sadd.s32 %s24, %s25
          %s176 = ssub.s32 2048, 2048
          %177 = vsyncadd %s170, %s176
          %s178 = smul.addr %s174, 64
          %s179 = scalar_lea.hbm %s1, %s178
          %s180 = sshll.u32 %s173, 4
          %s181 = int_to_ptr.vmem [resolvable:$true] %s180
          %186 = dma.hbm_to_vmem [thread:$0]  %s179, 2048, %s181, %s170, 128, 64, 4
        $region24: #{tpu_custom_call.1} parent=19 // pred_fallthru
          _
      $region20: #{tpu_custom_call.1} parent=5 // pred_fallthru
        _
      %p187 = scmp.le.s32.totalorder 1, %s17
      %p188 = scmp.lt.s32.totalorder %s17, 3
      %p189 = pnand %p187, %p188
      %p190 = pneg %p189
      // Predicated region
      $region25: #{tpu_custom_call.1} parent=5 // pred_check
        _
      $region26: #{tpu_custom_call.1} parent=5 // pred_check_branch
        %192 = sbr.rel (%p189) target = $region28
      $region27: #{tpu_custom_call.1} parent=5 // pred_region
        %s193 = ssub.s32 %s17, 1
        // Predicated region
        $region29: #{tpu_custom_call.1} parent=27 // pred_check
          %p194 = pneg %p50
        $region30: #{tpu_custom_call.1} parent=27 // pred_check_branch
          %196 = sbr.rel (%p194) target = $region32
        $region31: #{tpu_custom_call.1} parent=27 // pred_region
          %197 = dma.done [#allocation3], 256
        $region32: #{tpu_custom_call.1} parent=27 // pred_fallthru
          _
        %s198 = sand.u32 %s65, 1
        %s199 = scalar_lea.sflag [#allocation6], %s198
        %s200 = sand.u32 %s65, 1
        %s201 = smul.addr %s200, 128
        %s202 = scalar_lea.vmem [#allocation5], %s201
        // Predicated region
        $region33: #{tpu_custom_call.1} parent=27 // pred_check
          %p203 = pneg %p78
        $region34: #{tpu_custom_call.1} parent=27 // pred_check_branch
          %205 = sbr.rel (%p203) target = $region36
        $region35: #{tpu_custom_call.1} parent=27 // pred_region
          %206 = dma.done %s199, 2048
        $region36: #{tpu_custom_call.1} parent=27 // pred_fallthru
          _
        %p207 = pneg %p50
        %p208 = pneg %p47
        %s209 = sand.u32 %s65, 1
        %s210 = scalar_lea.sflag [#allocation6], %s209
        %s211 = sand.u32 %s65, 1
        %s212 = smul.addr %s211, 128
        %s213 = scalar_lea.vmem [#allocation5], %s212
        %p214 = pneg %p78
        %p215 = pneg %p75
        %p216 = pneg %p106
        %p217 = pneg %p103
        %s218 = sand.u32 %s93, 1
        %s219 = scalar_lea.sflag [#allocation4], %s218
        %s220 = sand.u32 %s93, 1
        %s221 = smul.addr %s220, 8
        %s222 = scalar_lea.vmem [#allocation7], %s221
        %p223 = pneg %p134
        %p224 = pneg %p131
        %p225 = scmp.lt.s32.totalorder %s26, 1
        %s226 = scalar_select %p225, %s26, 1
        %p227 = scmp.lt.s32.totalorder %s27, 0
        %s228 = scalar_select %p227, %s27, 0
        %s229 = smul.addr %s228, 2
        %s230 = smul.addr %s226, 2
        %s231 = sadd.s32 %s229, %s230
        %s232 = smul.addr %s231, 8
        %s233 = scalar_lea.vmem %s3, %s232
        %s234 = sadd.s32 %s26, %s27
        %p235 = scmp.lt.s32.totalorder %s26, 1
        %s236 = scalar_select %p235, %s26, 1
        %p237 = scmp.lt.s32.totalorder %s27, 0
        %s238 = scalar_select %p237, %s27, 0
        %s239 = smul.addr %s238, 2
        %s240 = smul.addr %s236, 2
        %s241 = sadd.s32 %s239, %s240
        %s242 = smul.addr %s241, 8
        %s243 = scalar_lea.vmem %s3, %s242
        %v245 = vld [vmem:[#allocation2] sm:$0xff]
        %v246 = vld [vmem:[#allocation2 + $0x8] sm:$0xff]
        %v247 = vld [vmem:[%s202] sm:$0xf]
        %v248 = vld [vmem:[%s202 + $0x4] sm:$0xf]
        %v249 = vld [vmem:[%s202 + $0x8] sm:$0xf]
        %v250 = vld [vmem:[%s202 + $0xc] sm:$0xf]
        %v251 = vld [vmem:[%s202 + $0x10] sm:$0xf]
        %v252 = vld [vmem:[%s202 + $0x14] sm:$0xf]
        %v253 = vld [vmem:[%s202 + $0x18] sm:$0xf]
        %v254 = vld [vmem:[%s202 + $0x1c] sm:$0xf]
        %v255 = vld [vmem:[%s202 + $0x20] sm:$0xf]
        %v256 = vld [vmem:[%s202 + $0x24] sm:$0xf]
        %v257 = vld [vmem:[%s202 + $0x28] sm:$0xf]
        %v258 = vld [vmem:[%s202 + $0x2c] sm:$0xf]
        %v259 = vld [vmem:[%s202 + $0x30] sm:$0xf]
        %v260 = vld [vmem:[%s202 + $0x34] sm:$0xf]
        %v261 = vld [vmem:[%s202 + $0x38] sm:$0xf]
        %v262 = vld [vmem:[%s202 + $0x3c] sm:$0xf]
        %v263 = vld [vmem:[%s202 + $0x40] sm:$0xf]
        %v264 = vld [vmem:[%s202 + $0x44] sm:$0xf]
        %v265 = vld [vmem:[%s202 + $0x48] sm:$0xf]
        %v266 = vld [vmem:[%s202 + $0x4c] sm:$0xf]
        %v267 = vld [vmem:[%s202 + $0x50] sm:$0xf]
        %v268 = vld [vmem:[%s202 + $0x54] sm:$0xf]
        %v269 = vld [vmem:[%s202 + $0x58] sm:$0xf]
        %v270 = vld [vmem:[%s202 + $0x5c] sm:$0xf]
        %v271 = vld [vmem:[%s202 + $0x60] sm:$0xf]
        %v272 = vld [vmem:[%s202 + $0x64] sm:$0xf]
        %v273 = vld [vmem:[%s202 + $0x68] sm:$0xf]
        %v274 = vld [vmem:[%s202 + $0x6c] sm:$0xf]
        %v275 = vld [vmem:[%s202 + $0x70] sm:$0xf]
        %v276 = vld [vmem:[%s202 + $0x74] sm:$0xf]
        %v277 = vld [vmem:[%s202 + $0x78] sm:$0xf]
        %v278 = vld [vmem:[%s202 + $0x7c] sm:$0xf]
        %v281 = vunpack.c.l.b16 %v245
        %v282 = vunpack.c.h.b16 %v245
        %v283 = vunpack.c.l.b16 %v246
        %v284 = vunpack.c.h.b16 %v246
        %v285 = vpack.c.b16 %v283, %v281
        %v286 = vpack.c.b16 %v284, %v282
        %v321 = vunpack.c.l.b16 %v247
        %v322 = vunpack.c.l.b16 %v248
        %v323 = vunpack.c.l.b16 %v249
        %v324 = vunpack.c.l.b16 %v250
        %v325 = vunpack.c.l.b16 %v251
        %v326 = vunpack.c.l.b16 %v252
        %v327 = vunpack.c.l.b16 %v253
        %v328 = vunpack.c.l.b16 %v254
        %v329 = vunpack.c.l.b16 %v255
        %v330 = vunpack.c.l.b16 %v256
        %v331 = vunpack.c.l.b16 %v257
        %v332 = vunpack.c.l.b16 %v258
        %v333 = vunpack.c.l.b16 %v259
        %v334 = vunpack.c.l.b16 %v260
        %v335 = vunpack.c.l.b16 %v261
        %v336 = vunpack.c.l.b16 %v262
        %v337 = vunpack.c.l.b16 %v263
        %v338 = vunpack.c.l.b16 %v264
        %v339 = vunpack.c.l.b16 %v265
        %v340 = vunpack.c.l.b16 %v266
        %v341 = vunpack.c.l.b16 %v267
        %v342 = vunpack.c.l.b16 %v268
        %v343 = vunpack.c.l.b16 %v269
        %v344 = vunpack.c.l.b16 %v270
        %v345 = vunpack.c.l.b16 %v271
        %v346 = vunpack.c.l.b16 %v272
        %v347 = vunpack.c.l.b16 %v273
        %v348 = vunpack.c.l.b16 %v274
        %v349 = vunpack.c.l.b16 %v275
        %v350 = vunpack.c.l.b16 %v276
        %v351 = vunpack.c.l.b16 %v277
        %v352 = vunpack.c.l.b16 %v278
        %v353 = vpack.c.b16 %v322, %v321
        %v354 = vpack.c.b16 %v324, %v323
        %v355 = vpack.c.b16 %v326, %v325
        %v356 = vpack.c.b16 %v328, %v327
        %v357 = vpack.c.b16 %v330, %v329
        %v358 = vpack.c.b16 %v332, %v331
        %v359 = vpack.c.b16 %v334, %v333
        %v360 = vpack.c.b16 %v336, %v335
        %v361 = vpack.c.b16 %v338, %v337
        %v362 = vpack.c.b16 %v340, %v339
        %v363 = vpack.c.b16 %v342, %v341
        %v364 = vpack.c.b16 %v344, %v343
        %v365 = vpack.c.b16 %v346, %v345
        %v366 = vpack.c.b16 %v348, %v347
        %v367 = vpack.c.b16 %v350, %v349
        %v368 = vpack.c.b16 %v352, %v351
        %385 = vmatprep.subr.bf16.mxu0 0
        %386 = vmatpush1.bf16.msra.mxu0 %v353
        %387 = vmatprep.subr.bf16.mxu0 0
        %388 = vmatpush1.bf16.msra.mxu0 %v354
        %389 = vmatprep.subr.bf16.mxu0 0
        %390 = vmatpush1.bf16.msra.mxu0 %v355
        %391 = vmatprep.subr.bf16.mxu0 0
        %392 = vmatpush1.bf16.msra.mxu0 %v356
        %393 = vmatprep.subr.bf16.mxu0 0
        %394 = vmatpush1.bf16.msra.mxu0 %v357
        %395 = vmatprep.subr.bf16.mxu0 0
        %396 = vmatpush1.bf16.msra.mxu0 %v358
        %397 = vmatprep.subr.bf16.mxu0 0
        %398 = vmatpush1.bf16.msra.mxu0 %v359
        %399 = vmatprep.subr.bf16.mxu0 0
        %400 = vmatpush1.bf16.msra.mxu0 %v360
        %401 = vmatprep.subr.bf16.mxu0 0
        %402 = vmatpush1.bf16.msra.mxu0 %v361
        %403 = vmatprep.subr.bf16.mxu0 0
        %404 = vmatpush1.bf16.msra.mxu0 %v362
        %405 = vmatprep.subr.bf16.mxu0 0
        %406 = vmatpush1.bf16.msra.mxu0 %v363
        %407 = vmatprep.subr.bf16.mxu0 0
        %408 = vmatpush1.bf16.msra.mxu0 %v364
        %409 = vmatprep.subr.bf16.mxu0 0
        %410 = vmatpush1.bf16.msra.mxu0 %v365
        %411 = vmatprep.subr.bf16.mxu0 0
        %412 = vmatpush1.bf16.msra.mxu0 %v366
        %413 = vmatprep.subr.bf16.mxu0 0
        %414 = vmatpush1.bf16.msra.mxu0 %v367
        %415 = vmatprep.subr.bf16.mxu0 0
        %416 = vmatpush1.bf16.msra.mxu0 %v368
        %417 = vmatprep.mubr.bf16.mxu0 %v286
        %418 = vmatmul.mubr.bf16.gmra.mrb[0].mxu0 %v285
        %v419 = vpop.f32.mrb[0].mxu0
        %v420 = vadd.f32 0.0, %v419
        %v421 = vpop.f32.mrb[0].mxu0
        %v422 = vpop.f32.mrb[0].mxu0
        %v423 = vadd.f32 0.0, %v422
        %v424 = vpop.f32.mrb[0].mxu0
        %425 = vdwg.mxu0
        %v426 = vmax.f32 %v420, 0.0
        %v427 = vmax.f32 %v423, 0.0
        %v428 = vpack.c.bf16 %v427, %v426
        %v430 = vunpack.c.l.b16 %v428
        %v431 = vunpack.c.h.b16 %v428
        %v432 = vpack.c.b16 %v430, %v430
        %v433 = vpack.c.b16 %v431, %v431
        %436 = vst [vmem:[%s222] sm:$0xf] %v432
        %437 = vst [vmem:[%s222 + $0x4] sm:$0xf] %v433
        %438 = vadd.xlane.f32.xlu0 %v426
        %v439 = vpop.xlane.xlu0 %438
        %440 = vadd.xlane.f32.xlu0 %v427
        %v441 = vpop.xlane.xlu0 %440
        %vm442 = vcmask 7168
        %443 = vst.msk [vmem:[%s243] sm:$0xff] %vm442, %v439
        %444 = vst.msk [vmem:[%s243 + $0x8] sm:$0xff] %vm442, %v441
        %v445 = vmul.f32 %v426, %v426
        %v446 = vmul.f32 %v427, %v427
        %447 = vadd.xlane.f32.xlu0 %v445
        %v448 = vpop.xlane.xlu0 %447
        %449 = vadd.xlane.f32.xlu0 %v446
        %v450 = vpop.xlane.xlu0 %449
        %vm451 = vcmask 15368
        %452 = vst.msk [vmem:[%s243] sm:$0xff] %vm451, %v448
        %453 = vst.msk [vmem:[%s243 + $0x8] sm:$0xff] %vm451, %v450
        %s454 = sand.u32 %s93, 1
        %s455 = scalar_lea.sflag [#allocation4], %s454
        %s456 = sand.u32 %s93, 1
        %s457 = smul.addr %s456, 8
        %s458 = scalar_lea.vmem [#allocation7], %s457
        %p459 = scmp.lt.s32.totalorder %s26, 1
        %s460 = scalar_select %p459, %s26, 1
        %p461 = scmp.lt.s32.totalorder %s27, 0
        %s462 = scalar_select %p461, %s27, 0
        %s463 = smul.addr %s462, 2
        %s464 = smul.addr %s460, 2
        %s465 = sadd.s32 %s463, %s464
        %s466 = smul.addr %s465, 8
        %s467 = scalar_lea.vmem %s3, %s466
        // Predicated region
        $region37: #{tpu_custom_call.1} parent=27 // pred_check
          %p468 = pneg %p103
        $region38: #{tpu_custom_call.1} parent=27 // pred_check_branch
          %470 = sbr.rel (%p468) target = $region40
        $region39: #{tpu_custom_call.1} parent=27 // pred_region
          %s472 = ssub.s32 128, 128
          %473 = vsyncadd %s455, %s472
          %s474 = smul.addr %s26, 2
          %s475 = sadd.s32 %s27, %s474
          %s476 = smul.addr %s475, 64
          %s477 = scalar_lea.hbm %s2, %s476
          %s478 = sshll.u32 %s458, 4
          %s479 = int_to_ptr.vmem [resolvable:$true] %s478
          %484 = dma.vmem_to_hbm [thread:$0]  %s479, 128, %s477, %s455, 64, 64, 4
        $region40: #{tpu_custom_call.1} parent=27 // pred_fallthru
          _
        // Predicated region
        $region41: #{tpu_custom_call.1} parent=27 // pred_check
          %p485 = pneg %p131
        $region42: #{tpu_custom_call.1} parent=27 // pred_check_branch
          %487 = sbr.rel (%p485) target = $region44
        $region43: #{tpu_custom_call.1} parent=27 // pred_region
          _
        $region44: #{tpu_custom_call.1} parent=27 // pred_fallthru
          _
      $region28: #{tpu_custom_call.1} parent=5 // pred_fallthru
        _
      %p488 = scmp.le.s32.totalorder 2, %s17
      // Predicated region
      $region45: #{tpu_custom_call.1} parent=5 // pred_check
        %p489 = pneg %p488
      $region46: #{tpu_custom_call.1} parent=5 // pred_check_branch
        %491 = sbr.rel (%p489) target = $region48
      $region47: #{tpu_custom_call.1} parent=5 // pred_region
        %s492 = ssub.s32 %s17, 2
        // Predicated region
        $region49: #{tpu_custom_call.1} parent=47 // pred_check
          %p493 = pneg %p109
        $region50: #{tpu_custom_call.1} parent=47 // pred_check_branch
          %495 = sbr.rel (%p493) target = $region52
        $region51: #{tpu_custom_call.1} parent=47 // pred_region
          %s496 = sand.u32 %s94, 1
          %s497 = scalar_lea.sflag [#allocation4], %s496
          %s498 = sand.u32 %s94, 1
          %s499 = smul.addr %s498, 8
          %s500 = scalar_lea.vmem [#allocation7], %s499
          %501 = dma.done %s497, 128
        $region52: #{tpu_custom_call.1} parent=47 // pred_fallthru
          _
        // Predicated region
        $region53: #{tpu_custom_call.1} parent=47 // pred_check
          %p502 = pneg %p137
        $region54: #{tpu_custom_call.1} parent=47 // pred_check_branch
          %504 = sbr.rel (%p502) target = $region56
        $region55: #{tpu_custom_call.1} parent=47 // pred_region
          %p505 = scmp.lt.s32.totalorder %s28, 1
          %s506 = scalar_select %p505, %s28, 1
          %p507 = scmp.lt.s32.totalorder %s29, 0
          %s508 = scalar_select %p507, %s29, 0
          %s509 = smul.addr %s508, 2
          %s510 = smul.addr %s506, 2
          %s511 = sadd.s32 %s509, %s510
          %s512 = smul.addr %s511, 8
          %s513 = scalar_lea.vmem %s3, %s512
        $region56: #{tpu_custom_call.1} parent=47 // pred_fallthru
          _
      $region48: #{tpu_custom_call.1} parent=5 // pred_fallthru
        _
    $region6: #{tpu_custom_call.1} parent=1 // loop_footer
      %s21 = sadd.s32 1, %s17
    $region7: #{tpu_custom_call.1} parent=1 // loop_footer_branch
      %16 = sbr.rel target = $region3
    $region8: #{tpu_custom_call.1} parent=1 // loop_exit
      _
    %514 = vsyncpa [#allocation3], 1
    %s515 = scalar_lea.sflag [#allocation3], 1
    %516 = vsyncpa %s515, 1
    %517 = vsyncpa [#allocation6], 1
    %s518 = scalar_lea.sflag [#allocation6], 1
    %519 = vsyncpa %s518, 1
    %520 = vsyncpa [#allocation4], 1
    %s521 = scalar_lea.sflag [#allocation4], 1
    %522 = vsyncpa %s521, 1

</llo_original>
